<compile_context>
chip_gen: v6e
topology: v6e:2x2x1
jax: 0.10.0
libtpu: 0.0.40
codegen_flags: <defaults>
</compile_context>

<pallas_src>
import functools

import jax
import jax.numpy as jnp
from jax.experimental import pallas as pl
from jax.experimental.pallas import tpu as pltpu


def _round_up(x, m):
    return ((x + m - 1) // m) * m


def _ce_loss_kernel(logits_ref, tgt_ref, num_ref, den_ref, *,
                    n_valid_elems, w_real, w_fake):
    """One (tm, 128) interleaved tile: even lanes = class-0 logit, odd = class-1."""
    c = pl.program_id(0)            # core-split axis ("parallel")
    s = pl.program_id(1)            # reduction axis ("arbitrary")
    steps = pl.num_programs(1)

    # Output blocks double as per-core accumulators (resident across `s`).
    @pl.when(s == 0)
    def _():
        num_ref[...] = jnp.zeros_like(num_ref)
        den_ref[...] = jnp.zeros_like(den_ref)

    x = logits_ref[...].astype(jnp.float32)    # (tm, 128) interleaved logits
    t = tgt_ref[...].astype(jnp.int32)         # (tm, 128) per-sample target (repeated)
    tm = x.shape[0]

    lane = jax.lax.broadcasted_iota(jnp.int32, (tm, 128), 1)
    row = jax.lax.broadcasted_iota(jnp.int32, (tm, 128), 0)
    parity = jnp.bitwise_and(lane, 1)          # class carried by this lane
    even = parity == 0

    # Class partner of every lane (r1 for even lanes, r0 for odd lanes).
    # The wrapped-around lanes are never selected by `even`, so wrap is harmless.
    partner = jnp.where(even,
                        pltpu.roll(x, 127, axis=1),   # x[lane + 1]
                        pltpu.roll(x, 1, axis=1))     # x[lane - 1]

    # logsumexp(r0, r1) - x  ==  softplus(partner - x), numerically stable.
    # (log(1+e) kept instead of log1p to stay on guaranteed-lowered primitives;
    #  absolute error vs log1p is ~1e-7-class here.)
    z = partner - x
    nll = jnp.maximum(z, 0.0) + jnp.log(1.0 + jnp.exp(-jnp.abs(z)))

    w_lane = jnp.where(parity == 1, jnp.float32(w_fake), jnp.float32(w_real))

    # A lane contributes iff its class equals the sample's target.
    # TODO(synk): ignore_index=-100 / out-of-range labels are silently dropped.
    sel = t == parity

    # Global element id, computed from the *unclamped* block id so that padded
    # elements, partial boundary blocks, and the duplicated tail block (odd
    # number of row-blocks split over 2 cores) are all masked out.  The FULL
    # term is masked, not just the weight.
    g = c * steps + s
    elem = (g * tm + row) * 128 + lane
    keep = jnp.logical_and(sel, elem < n_valid_elems)

    term = jnp.where(keep, w_lane * nll, 0.0)
    dterm = jnp.where(keep, w_lane, 0.0)

    if tm % 8 == 0:     # reduce sublane groups into the fixed (8, 128) block
        num_ref[...] += term.reshape(tm // 8, 8, 128).sum(axis=0)
        den_ref[...] += dterm.reshape(tm // 8, 8, 128).sum(axis=0)
    else:               # tiny-input fallback (whole array fits in < 8 rows)
        num_ref[0:1, :] += jnp.sum(term, axis=0, keepdims=True)
        den_ref[0:1, :] += jnp.sum(dterm, axis=0, keepdims=True)


def weighted_cross_entropy_loss(outputs, target, w_real, w_fake, *,
                                block_rows=4096):
    """outputs: (N, 2) float; target: (N,) int; w_real/w_fake: python floats."""
    N, C = outputs.shape
    assert C == 2, "kernel is specialized for 2 classes (real / fake)"
    n_elems = 2 * N

    # Natural row-major (N, 2) buffer viewed as a lane-dense slab: no transpose,
    # no cast, no copy.  Even lanes hold class-0 logits, odd lanes class-1.
    flat = outputs.reshape(n_elems)
    # Targets expanded to the same interleaved layout as int8 (2 B/sample).
    tgt_rep = jnp.repeat(target.astype(jnp.int8), 2)

    padded = _round_up(n_elems, 128)
    if padded != n_elems:            # only when N % 64 != 0
        flat = jnp.pad(flat, (0, padded - n_elems))
        tgt_rep = jnp.pad(tgt_rep, (0, padded - n_elems))

    rows = padded // 128
    logits2d = flat.reshape(rows, 128)
    tgt2d = tgt_rep.reshape(rows, 128)

    tm = min(block_rows, rows)               # (tm, 128) f32 tile, <= 2 MiB
    total_blocks = pl.cdiv(rows, tm)
    steps = pl.cdiv(total_blocks, 2)         # 2-way split feeds both v7x TCs

    kernel = functools.partial(_ce_loss_kernel, n_valid_elems=n_elems,
                               w_real=float(w_real), w_fake=float(w_fake))

    def blk_idx(c, s):                       # clamp the duplicated tail block
        return (jnp.minimum(c * steps + s, total_blocks - 1), 0)

    num, den = pl.pallas_call(
        kernel,
        out_shape=(jax.ShapeDtypeStruct((16, 128), jnp.float32),   # rows 0-7: core 0
                   jax.ShapeDtypeStruct((16, 128), jnp.float32)),  # rows 8-15: core 1
        grid=(2, steps),
        in_specs=[
            pl.BlockSpec((tm, 128), blk_idx),
            pl.BlockSpec((tm, 128), blk_idx),
        ],
        out_specs=[
            pl.BlockSpec((8, 128), lambda c, s: (c, 0)),
            pl.BlockSpec((8, 128), lambda c, s: (c, 0)),
        ],
        compiler_params=pltpu.CompilerParams(
            dimension_semantics=("parallel", "arbitrary")),
    )(logits2d, tgt2d)

    # Tiny final reduction + weighted mean (PyTorch 'mean' with class weights).
    # Note: den == 0 (N == 0) yields NaN, matching PyTorch.
    return jnp.sum(num) / jnp.sum(den)


class LossPallas:
    """Pallas equivalent of the PyTorch `Loss` module (weighted 2-class CE)."""

    def __init__(self, class_real=364, class_fake=3068):
        num_samples = class_real + class_fake
        self.real_weight = num_samples / (2.0 * class_real)
        self.fake_weight = num_samples / (2.0 * class_fake)
        self.class_weights = jnp.array(
            [self.real_weight, self.fake_weight], dtype=jnp.float32)

    def __call__(self, outputs, target):
        return weighted_cross_entropy_loss(
            outputs, target, self.real_weight, self.fake_weight)


if __name__ == "__main__":
    key = jax.random.PRNGKey(0)
    k1, k2 = jax.random.split(key)

    N, C = 256, 2  # small N, 2 classes (real / fake)
    outputs = jax.random.normal(k1, (N, C), dtype=jnp.float32)
    target = jax.random.randint(k2, (N,), 0, C, dtype=jnp.int32)

    loss_mod = LossPallas(class_real=364, class_fake=3068)
    loss = jax.block_until_ready(loss_mod(outputs, target))

    # reference check (pure JAX) — same weighted-mean CE semantics as PyTorch
    logits = outputs.astype(jnp.float32)
    lse = jax.scipy.special.logsumexp(logits, axis=-1)
    tgt_logit = jnp.take_along_axis(logits, target[:, None], axis=-1)[:, 0]
    w = loss_mod.class_weights[target]
    ref = jnp.sum(w * (lse - tgt_logit)) / jnp.sum(w)
    assert jnp.allclose(loss, ref, rtol=1e-5, atol=1e-5), (loss, ref)

    print("KERNEL_OK")
</pallas_src>

<mosaic_0001>
module attributes {stable_mosaic.version = 11 : i64} {
  func.func @_ce_loss_kernel(%arg0: i32, %arg1: i32, %arg2: memref<4x128xf32, #tpu.memory_space<vmem>>, %arg3: memref<4x128xi8, #tpu.memory_space<vmem>>, %arg4: memref<8x128xf32, #tpu.memory_space<vmem>>, %arg5: memref<8x128xf32, #tpu.memory_space<vmem>>) attributes {dimension_semantics = [#tpu.dimension_semantics<parallel>, #tpu.dimension_semantics<arbitrary>], iteration_bounds = array<i64: 2, 1>, scalar_prefetch = 0 : i64, scratch_operands = 0 : i64, tpu.core_type = #tpu.core_type<tc>, window_params = [{transform_indices = @transform_0, window_bounds = array<i64: 4, 128>}, {transform_indices = @transform_1, window_bounds = array<i64: 4, 128>}, {transform_indices = @transform_2, window_bounds = array<i64: 8, 128>}, {transform_indices = @transform_3, window_bounds = array<i64: 8, 128>}]} {
    %c0_i32 = arith.constant 0 : i32
    %0 = arith.cmpi eq, %arg1, %c0_i32 : i32
    %1 = arith.extui %0 : i1 to i32
    %c0_i32_0 = arith.constant 0 : i32
    %2 = arith.cmpi ne, %1, %c0_i32_0 : i32
    scf.if %2 {
      %cst_24 = arith.constant 0.000000e+00 : f32
      %58 = vector.broadcast %cst_24 : f32 to vector<8x128xf32>
      %c0_25 = arith.constant 0 : index
      %c0_26 = arith.constant 0 : index
      %59 = vector.load %arg4[%c0_25, %c0_26] : memref<8x128xf32, #tpu.memory_space<vmem>>, vector<8x128xf32>
      tpu.vector_store %arg4[%c0_25, %c0_26], %58 {strides = array<i32>} : memref<8x128xf32, #tpu.memory_space<vmem>>, vector<8x128xf32>,
      %cst_27 = arith.constant 0.000000e+00 : f32
      %60 = vector.broadcast %cst_27 : f32 to vector<8x128xf32>
      %c0_28 = arith.constant 0 : index
      %c0_29 = arith.constant 0 : index
      %61 = vector.load %arg5[%c0_28, %c0_29] : memref<8x128xf32, #tpu.memory_space<vmem>>, vector<8x128xf32>
      tpu.vector_store %arg5[%c0_28, %c0_29], %60 {strides = array<i32>} : memref<8x128xf32, #tpu.memory_space<vmem>>, vector<8x128xf32>,
    } else {
    }
    %c0 = arith.constant 0 : index
    %c0_1 = arith.constant 0 : index
    %3 = vector.load %arg2[%c0, %c0_1] : memref<4x128xf32, #tpu.memory_space<vmem>>, vector<4x128xf32>
    %c0_2 = arith.constant 0 : index
    %c0_3 = arith.constant 0 : index
    %4 = vector.load %arg3[%c0_2, %c0_3] : memref<4x128xi8, #tpu.memory_space<vmem>>, vector<4x128xi8>
    %5 = arith.extsi %4 : vector<4x128xi8> to vector<4x128xi32>
    %6 = tpu.iota {dimensions = array<i32: 1>} : vector<4x128xi32>
    %7 = tpu.iota {dimensions = array<i32: 0>} : vector<4x128xi32>
    %c1_i32 = arith.constant 1 : i32
    %8 = vector.broadcast %c1_i32 : i32 to vector<4x128xi32>
    %9 = arith.andi %6, %8 : vector<4x128xi32>
    %c0_i32_4 = arith.constant 0 : i32
    %10 = vector.broadcast %c0_i32_4 : i32 to vector<4x128xi32>
    %11 = arith.cmpi eq, %9, %10 : vector<4x128xi32>
    %c127_i32 = arith.constant 127 : i32
    %12 = tpu.dynamic_rotate %3 by %c127_i32 dim 1 : vector<4x128xf32>, i32 -> vector<4x128xf32>
    %c1_i32_5 = arith.constant 1 : i32
    %13 = tpu.dynamic_rotate %3 by %c1_i32_5 dim 1 : vector<4x128xf32>, i32 -> vector<4x128xf32>
    %14 = arith.select %11, %12, %13 : vector<4x128xi1>, vector<4x128xf32>
    %15 = arith.subf %14, %3 : vector<4x128xf32>
    %cst = arith.constant 0.000000e+00 : f32
    %16 = vector.broadcast %cst : f32 to vector<4x128xf32>
    %17 = arith.maximumf %15, %16 : vector<4x128xf32>
    %18 = math.absf %15 : vector<4x128xf32>
    %cst_6 = arith.constant 0.000000e+00 : f32
    %19 = vector.broadcast %cst_6 : f32 to vector<4x128xf32>
    %20 = arith.subf %19, %18 : vector<4x128xf32>
    %21 = math.exp %20 : vector<4x128xf32>
    %cst_7 = arith.constant 1.000000e+00 : f32
    %22 = vector.broadcast %cst_7 : f32 to vector<4x128xf32>
    %23 = arith.addf %22, %21 : vector<4x128xf32>
    %24 = math.log %23 : vector<4x128xf32>
    %25 = arith.addf %17, %24 : vector<4x128xf32>
    %c1_i32_8 = arith.constant 1 : i32
    %26 = vector.broadcast %c1_i32_8 : i32 to vector<4x128xi32>
    %27 = arith.cmpi eq, %9, %26 : vector<4x128xi32>
    %cst_9 = arith.constant 0.559322059 : f32
    %cst_10 = arith.constant 4.71428585 : f32
    %28 = vector.broadcast %cst_9 : f32 to vector<4x128xf32>
    %29 = vector.broadcast %cst_10 : f32 to vector<4x128xf32>
    %30 = arith.select %27, %28, %29 : vector<4x128xi1>, vector<4x128xf32>
    %31 = arith.cmpi eq, %5, %9 : vector<4x128xi32>
    %c1_i32_11 = arith.constant 1 : i32
    %32 = arith.muli %arg0, %c1_i32_11 : i32
    %33 = arith.addi %32, %arg1 : i32
    %c4_i32 = arith.constant 4 : i32
    %34 = arith.muli %33, %c4_i32 : i32
    %35 = vector.broadcast %34 : i32 to vector<4x128xi32>
    %36 = arith.addi %35, %7 : vector<4x128xi32>
    %c128_i32 = arith.constant 128 : i32
    %37 = vector.broadcast %c128_i32 : i32 to vector<4x128xi32>
    %38 = arith.muli %36, %37 : vector<4x128xi32>
    %39 = arith.addi %38, %6 : vector<4x128xi32>
    %c512_i32 = arith.constant 512 : i32
    %40 = vector.broadcast %c512_i32 : i32 to vector<4x128xi32>
    %41 = arith.cmpi slt, %39, %40 : vector<4x128xi32>
    %42 = arith.andi %31, %41 : vector<4x128xi1>
    %43 = arith.mulf %30, %25 : vector<4x128xf32>
    %cst_12 = arith.constant 0.000000e+00 : f32
    %44 = vector.broadcast %cst_12 : f32 to vector<4x128xf32>
    %45 = arith.select %42, %43, %44 : vector<4x128xi1>, vector<4x128xf32>
    %cst_13 = arith.constant 0.000000e+00 : f32
    %46 = vector.broadcast %cst_13 : f32 to vector<4x128xf32>
    %47 = arith.select %42, %30, %46 : vector<4x128xi1>, vector<4x128xf32>
    %c0_14 = arith.constant 0 : index
    %c0_15 = arith.constant 0 : index
    %48 = vector.load %arg4[%c0_14, %c0_15] : memref<8x128xf32, #tpu.memory_space<vmem>>, vector<1x128xf32>
    %cst_16 = arith.constant dense<0.000000e+00> : vector<128xf32>
    %49 = vector.multi_reduction <add>, %45, %cst_16 [0] : vector<4x128xf32> to vector<128xf32>
    %50 = vector.shape_cast %49 : vector<128xf32> to vector<1x128xf32>
    %51 = arith.addf %48, %50 : vector<1x128xf32>
    %c0_17 = arith.constant 0 : index
    %c0_18 = arith.constant 0 : index
    %52 = vector.load %arg4[%c0_17, %c0_18] : memref<8x128xf32, #tpu.memory_space<vmem>>, vector<1x128xf32>
    tpu.vector_store %arg4[%c0_17, %c0_18], %51 {strides = array<i32>} : memref<8x128xf32, #tpu.memory_space<vmem>>, vector<1x128xf32>,
    %c0_19 = arith.constant 0 : index
    %c0_20 = arith.constant 0 : index
    %53 = vector.load %arg5[%c0_19, %c0_20] : memref<8x128xf32, #tpu.memory_space<vmem>>, vector<1x128xf32>
    %cst_21 = arith.constant dense<0.000000e+00> : vector<128xf32>
    %54 = vector.multi_reduction <add>, %47, %cst_21 [0] : vector<4x128xf32> to vector<128xf32>
    %55 = vector.shape_cast %54 : vector<128xf32> to vector<1x128xf32>
    %56 = arith.addf %53, %55 : vector<1x128xf32>
    %c0_22 = arith.constant 0 : index
    %c0_23 = arith.constant 0 : index
    %57 = vector.load %arg5[%c0_22, %c0_23] : memref<8x128xf32, #tpu.memory_space<vmem>>, vector<1x128xf32>
    tpu.vector_store %arg5[%c0_22, %c0_23], %56 {strides = array<i32>} : memref<8x128xf32, #tpu.memory_space<vmem>>, vector<1x128xf32>,
    return
  }
  func.func @transform_0(%arg0: i32, %arg1: i32) -> (i32, i32) {
    %c1_i32 = arith.constant 1 : i32
    %0 = arith.muli %arg0, %c1_i32 : i32
    %1 = arith.addi %0, %arg1 : i32
    %c0_i32 = arith.constant 0 : i32
    %2 = arith.minsi %1, %c0_i32 : i32
    %c0_i32_0 = arith.constant 0 : i32
    %c0_i32_1 = arith.constant 0 : i32
    return %2, %c0_i32_0 : i32, i32
  }
  func.func @transform_1(%arg0: i32, %arg1: i32) -> (i32, i32) {
    %c1_i32 = arith.constant 1 : i32
    %0 = arith.muli %arg0, %c1_i32 : i32
    %1 = arith.addi %0, %arg1 : i32
    %c0_i32 = arith.constant 0 : i32
    %2 = arith.minsi %1, %c0_i32 : i32
    %c0_i32_0 = arith.constant 0 : i32
    %c0_i32_1 = arith.constant 0 : i32
    return %2, %c0_i32_0 : i32, i32
  }
  func.func @transform_2(%arg0: i32, %arg1: i32) -> (i32, i32) {
    %c0_i32 = arith.constant 0 : i32
    %c0_i32_0 = arith.constant 0 : i32
    return %arg0, %c0_i32 : i32, i32
  }
  func.func @transform_3(%arg0: i32, %arg1: i32) -> (i32, i32) {
    %c0_i32 = arith.constant 0 : i32
    %c0_i32_0 = arith.constant 0 : i32
    return %arg0, %c0_i32 : i32, i32
  }
}

</mosaic_0001>

<llo_original>
// kernel: tpu_custom_call.1
$region0: #{tpu_custom_call.1}
  #allocation0 [shape = 'u32[]', space=smem, size = 0x4, offset = 0x4, fixed_abs, tag = 'smem constant byte address 0x4 - core index']
  #allocation1 [shape = 'u32[144,128]{1,0:T(1,128)}', space=vmem, size = 0x12000, scoped, tag = 'internal scratch']
  %s0 = inlined_call_operand.hbm [shape: f32[4,128], index: 0, kind: input, shape index: {}]
  %s1 = inlined_call_operand.vmem [shape: s8[4,128], index: 1, kind: input, shape index: {}]
  %s2 = inlined_call_operand.hbm [shape: f32[16,128], index: 2, kind: output, shape index: {0}]
  %s3 = inlined_call_operand.hbm [shape: f32[16,128], index: 3, kind: output, shape index: {1}]
  %4 = xla_tuple %s2, %s3
  %s5 = sld [smem:[#allocation0]]
  $region57: #{tpu_custom_call.1} parent=0
    _
  %s7 = ssub.s32 1, %s5
  %s8 = scalar_select 0, %s7, %s5
  $region1: #{tpu_custom_call.1} parent=0
    #allocation2 [shape = 'u8[4096]{0}', space=vmem, size = 0x1000, scoped, tag = 'input window, operand 0']
    #allocation3 [shape = 's32[2]{0}', space=sflag, size = 0x8, scoped, tag = 'scoped memory for tpu_custom_call.1']
    #allocation4 [shape = 's32[2]{0}', space=sflag, size = 0x8, scoped, tag = 'scoped memory for tpu_custom_call.1']
    #allocation5 [shape = 'u8[8192]{0}', space=vmem, size = 0x2000, scoped, tag = 'output window, operand 0']
    #allocation6 [shape = 'u8[8192]{0}', space=vmem, size = 0x2000, scoped, tag = 'output window, operand 1']
    #allocation7 [shape = 's32[2]{0}', space=sflag, size = 0x8, scoped, tag = 'scoped memory for tpu_custom_call.1']
    %9 = vsyncpa [#allocation3], 0
    %s10 = scalar_lea.sflag [#allocation3], 1
    %11 = vsyncpa %s10, 0
    %12 = vsyncpa [#allocation4], 0
    %s13 = scalar_lea.sflag [#allocation4], 1
    %14 = vsyncpa %s13, 0
    %15 = vsyncpa [#allocation7], 0
    %s16 = scalar_lea.sflag [#allocation7], 1
    %17 = vsyncpa %s16, 0
    loop: start=0, step=1, limit=4
    $region2: #{tpu_custom_call.1} parent=1 // loop_pre_header
      _
    $region3: #{tpu_custom_call.1} parent=1 // loop_header
      %s19 = sphi 0, %s23
      %p20 = scmp.ge.s32.totalorder %s19, 4
      %s26 = sphi 0, %s38
      %s27 = sphi 0, %s34
      %s28 = sphi 0, %s26
      %s29 = sphi 0, %s27
      %s30 = sphi 0, %s28
      %s31 = sphi 0, %s29
      %s47 = sphi 0, %s49
      %s50 = sphi 0, %s47
      %s51 = sphi 0, %s50
      %s67 = sphi 0, %s51
      %s79 = sphi 0, %s81
      %s82 = sphi 0, %s79
      %s83 = sphi 0, %s82
      %s99 = sphi 0, %s83
      %s105 = sphi 0, %s107
      %s108 = sphi 0, %s105
      %s109 = sphi 0, %s108
      %s125 = sphi 0, %s109
      %s131 = sphi 0, %s133
      %s134 = sphi 0, %s131
      %s135 = sphi 0, %s134
      %s151 = sphi 0, %s135
    $region4: #{tpu_custom_call.1} parent=1 // loop_header_branch
      %22 = sbr.rel (%p20) target = $region8
    $region5: #{tpu_custom_call.1} parent=1 // loop_body
      %s24 = ssub.s32 %s19, 1
      %s25 = ssub.s32 %s19, 2
      %s32 = sadd.s32 1, %s27
      %p33 = scmp.ge.s32.totalorder %s32, 1
      %s34 = scalar_select %p33, 0, %s32
      %s35 = sadd.s32 1, %s26
      %s36 = scalar_select %p33, %s35, %s26
      %p37 = scmp.ge.s32.totalorder %s36, 2
      %s38 = scalar_select %p37, 0, %s36
      %s39 = sadd.s32 %s26, %s27
      %p40 = scmp.lt.s32.totalorder %s39, 0
      %s41 = scalar_select %p40, %s39, 0
      %s42 = sadd.s32 %s38, %s34
      %p43 = scmp.lt.s32.totalorder %s42, 0
      %s44 = scalar_select %p43, %s42, 0
      %s45 = ssub.s32 %s41, %s44
      %p46 = scmp.eq.s32.totalorder %s45, 0
      %s48 = sadd.s32 %s47, 1
      %s49 = scalar_select %p46, %s47, %s48
      %p52 = pneg %p46
      %p53 = scmp.eq.s32.totalorder %s19, 1
      %p54 = por %p52, %p53
      %p55 = scmp.ne.s32.totalorder %s47, %s50
      %p56 = scmp.eq.s32.totalorder %s19, 0
      %p57 = por %p55, %p56
      %p58 = scmp.ne.s32.totalorder %s47, %s50
      %p59 = scmp.eq.s32.totalorder %s24, 1
      %p60 = por %p58, %p59
      %p61 = scmp.ne.s32.totalorder %s50, %s51
      %p62 = scmp.eq.s32.totalorder %s24, 0
      %p63 = por %p61, %p62
      %p64 = scmp.ne.s32.totalorder %s50, %s51
      %p65 = scmp.eq.s32.totalorder %s25, 1
      %p66 = por %p64, %p65
      %p68 = scmp.ne.s32.totalorder %s51, %s67
      %p69 = scmp.eq.s32.totalorder %s25, 0
      %p70 = por %p68, %p69
      %s71 = sadd.s32 %s26, %s27
      %p72 = scmp.lt.s32.totalorder %s71, 0
      %s73 = scalar_select %p72, %s71, 0
      %s74 = sadd.s32 %s38, %s34
      %p75 = scmp.lt.s32.totalorder %s74, 0
      %s76 = scalar_select %p75, %s74, 0
      %s77 = ssub.s32 %s73, %s76
      %p78 = scmp.eq.s32.totalorder %s77, 0
      %s80 = sadd.s32 %s79, 1
      %s81 = scalar_select %p78, %s79, %s80
      %p84 = pneg %p78
      %p85 = scmp.eq.s32.totalorder %s19, 1
      %p86 = por %p84, %p85
      %p87 = scmp.ne.s32.totalorder %s79, %s82
      %p88 = scmp.eq.s32.totalorder %s19, 0
      %p89 = por %p87, %p88
      %p90 = scmp.ne.s32.totalorder %s79, %s82
      %p91 = scmp.eq.s32.totalorder %s24, 1
      %p92 = por %p90, %p91
      %p93 = scmp.ne.s32.totalorder %s82, %s83
      %p94 = scmp.eq.s32.totalorder %s24, 0
      %p95 = por %p93, %p94
      %p96 = scmp.ne.s32.totalorder %s82, %s83
      %p97 = scmp.eq.s32.totalorder %s25, 1
      %p98 = por %p96, %p97
      %p100 = scmp.ne.s32.totalorder %s83, %s99
      %p101 = scmp.eq.s32.totalorder %s25, 0
      %p102 = por %p100, %p101
      %s103 = ssub.s32 %s26, %s38
      %p104 = scmp.eq.s32.totalorder %s103, 0
      %s106 = sadd.s32 %s105, 1
      %s107 = scalar_select %p104, %s105, %s106
      %p110 = pneg %p104
      %p111 = scmp.eq.s32.totalorder %s19, 1
      %p112 = por %p110, %p111
      %p113 = scmp.ne.s32.totalorder %s105, %s108
      %p114 = scmp.eq.s32.totalorder %s19, 0
      %p115 = por %p113, %p114
      %p116 = scmp.ne.s32.totalorder %s105, %s108
      %p117 = scmp.eq.s32.totalorder %s24, 1
      %p118 = por %p116, %p117
      %p119 = scmp.ne.s32.totalorder %s108, %s109
      %p120 = scmp.eq.s32.totalorder %s24, 0
      %p121 = por %p119, %p120
      %p122 = scmp.ne.s32.totalorder %s108, %s109
      %p123 = scmp.eq.s32.totalorder %s25, 1
      %p124 = por %p122, %p123
      %p126 = scmp.ne.s32.totalorder %s109, %s125
      %p127 = scmp.eq.s32.totalorder %s25, 0
      %p128 = por %p126, %p127
      %s129 = ssub.s32 %s26, %s38
      %p130 = scmp.eq.s32.totalorder %s129, 0
      %s132 = sadd.s32 %s131, 1
      %s133 = scalar_select %p130, %s131, %s132
      %p136 = pneg %p130
      %p137 = scmp.eq.s32.totalorder %s19, 1
      %p138 = por %p136, %p137
      %p139 = scmp.ne.s32.totalorder %s131, %s134
      %p140 = scmp.eq.s32.totalorder %s19, 0
      %p141 = por %p139, %p140
      %p142 = scmp.ne.s32.totalorder %s131, %s134
      %p143 = scmp.eq.s32.totalorder %s24, 1
      %p144 = por %p142, %p143
      %p145 = scmp.ne.s32.totalorder %s134, %s135
      %p146 = scmp.eq.s32.totalorder %s24, 0
      %p147 = por %p145, %p146
      %p148 = scmp.ne.s32.totalorder %s134, %s135
      %p149 = scmp.eq.s32.totalorder %s25, 1
      %p150 = por %p148, %p149
      %p152 = scmp.ne.s32.totalorder %s135, %s151
      %p153 = scmp.eq.s32.totalorder %s25, 0
      %p154 = por %p152, %p153
      %p155 = scmp.le.s32.totalorder 1, %s19
      %p156 = scmp.lt.s32.totalorder %s19, 3
      %p157 = pnand %p155, %p156
      %p158 = pneg %p157
      // Predicated region
      $region9: #{tpu_custom_call.1} parent=5 // pred_check
        _
      $region10: #{tpu_custom_call.1} parent=5 // pred_check_branch
        %160 = sbr.rel (%p157) target = $region12
      $region11: #{tpu_custom_call.1} parent=5 // pred_region
        %s161 = ssub.s32 %s19, 1
      $region12: #{tpu_custom_call.1} parent=5 // pred_fallthru
        _
      %p162 = scmp.lt.s32.totalorder %s19, 2
      // Predicated region
      $region13: #{tpu_custom_call.1} parent=5 // pred_check
        %p163 = pneg %p162
      $region14: #{tpu_custom_call.1} parent=5 // pred_check_branch
        %165 = sbr.rel (%p163) target = $region16
      $region15: #{tpu_custom_call.1} parent=5 // pred_region
        // Predicated region
        $region17: #{tpu_custom_call.1} parent=15 // pred_check
          %p166 = pneg %p57
        $region18: #{tpu_custom_call.1} parent=15 // pred_check_branch
          %168 = sbr.rel (%p166) target = $region20
        $region19: #{tpu_custom_call.1} parent=15 // pred_region
          %s169 = sand.u32 %s47, 1
          %s170 = scalar_lea.sflag [#allocation3], %s169
          %s171 = sand.u32 %s47, 1
          %s172 = smul.addr %s171, 4
          %s173 = scalar_lea.vmem [#allocation2], %s172
          %s174 = sadd.s32 %s26, %s27
          %p175 = scmp.lt.s32.totalorder %s174, 0
          %s176 = scalar_select %p175, %s174, 0
          %s178 = ssub.s32 64, 64
          %179 = vsyncadd %s170, %s178
          %s180 = smul.addr %s176, 64
          %s181 = scalar_lea.hbm %s0, %s180
          %s183 = sshll.u32 %s173, 4
          %s184 = int_to_ptr.vmem [resolvable:$true] %s183
          %186 = dma.hbm_to_vmem [thread:$0]  %s181, 64, %s184, %s170
        $region20: #{tpu_custom_call.1} parent=15 // pred_fallthru
          _
        // Predicated region
        $region21: #{tpu_custom_call.1} parent=15 // pred_check
          %p187 = pneg %p89
        $region22: #{tpu_custom_call.1} parent=15 // pred_check_branch
          %189 = sbr.rel (%p187) target = $region24
        $region23: #{tpu_custom_call.1} parent=15 // pred_region
          %s190 = sadd.s32 %s26, %s27
          %p191 = scmp.lt.s32.totalorder %s190, 0
          %s192 = scalar_select %p191, %s190, 0
          %p193 = scmp.lt.s32.totalorder %s192, 0
          %s194 = scalar_select %p193, %s192, 0
          %s195 = scalar_lea.vmem %s1, %s194
          %s196 = sadd.s32 %s26, %s27
          %p197 = scmp.lt.s32.totalorder %s196, 0
          %s198 = scalar_select %p197, %s196, 0
        $region24: #{tpu_custom_call.1} parent=15 // pred_fallthru
          _
      $region16: #{tpu_custom_call.1} parent=5 // pred_fallthru
        _
      %p199 = scmp.le.s32.totalorder 1, %s19
      %p200 = scmp.lt.s32.totalorder %s19, 3
      %p201 = pnand %p199, %p200
      %p202 = pneg %p201
      // Predicated region
      $region25: #{tpu_custom_call.1} parent=5 // pred_check
        _
      $region26: #{tpu_custom_call.1} parent=5 // pred_check_branch
        %204 = sbr.rel (%p201) target = $region28
      $region27: #{tpu_custom_call.1} parent=5 // pred_region
        %s205 = ssub.s32 %s19, 1
        %s206 = sand.u32 %s50, 1
        %s207 = scalar_lea.sflag [#allocation3], %s206
        %s208 = sand.u32 %s50, 1
        %s209 = smul.addr %s208, 4
        %s210 = scalar_lea.vmem [#allocation2], %s209
        // Predicated region
        $region29: #{tpu_custom_call.1} parent=27 // pred_check
          %p211 = pneg %p63
        $region30: #{tpu_custom_call.1} parent=27 // pred_check_branch
          %213 = sbr.rel (%p211) target = $region32
        $region31: #{tpu_custom_call.1} parent=27 // pred_region
          %214 = dma.done %s207, 64
        $region32: #{tpu_custom_call.1} parent=27 // pred_fallthru
          _
        %s215 = sand.u32 %s50, 1
        %s216 = scalar_lea.sflag [#allocation3], %s215
        %s217 = sand.u32 %s50, 1
        %s218 = smul.addr %s217, 4
        %s219 = scalar_lea.vmem [#allocation2], %s218
        %p220 = pneg %p63
        %p221 = pneg %p60
        %s222 = sadd.s32 %s28, %s29
        %p223 = scmp.lt.s32.totalorder %s222, 0
        %s224 = scalar_select %p223, %s222, 0
        %p225 = scmp.lt.s32.totalorder %s224, 0
        %s226 = scalar_select %p225, %s224, 0
        %s227 = scalar_lea.vmem %s1, %s226
        %p228 = pneg %p95
        %p229 = pneg %p92
        %p230 = pneg %p121
        %p231 = pneg %p118
        %s232 = sand.u32 %s108, 1
        %s233 = scalar_lea.sflag [#allocation4], %s232
        %s234 = sand.u32 %s108, 1
        %s235 = smul.addr %s234, 8
        %s236 = scalar_lea.vmem [#allocation5], %s235
        %p237 = pneg %p147
        %p238 = pneg %p144
        %s239 = sand.u32 %s134, 1
        %s240 = scalar_lea.sflag [#allocation7], %s239
        %s241 = sand.u32 %s134, 1
        %s242 = smul.addr %s241, 8
        %s243 = scalar_lea.vmem [#allocation6], %s242
        %s244 = sadd.s32 %s28, %s29
        %p245 = scmp.lt.s32.totalorder %s244, 0
        %s246 = scalar_select %p245, %s244, 0
        %s247 = sadd.s32 %s28, %s29
        %p248 = scmp.lt.s32.totalorder %s247, 0
        %s249 = scalar_select %p248, %s247, 0
        %p250 = scmp.lt.s32.totalorder %s249, 0
        %s251 = scalar_select %p250, %s249, 0
        %s252 = scalar_lea.vmem %s1, %s251
        %s253 = sadd.s32 %s28, %s29
        %p254 = scmp.lt.s32.totalorder %s253, 0
        %s255 = scalar_select %p254, %s253, 0
        %p256 = scmp.eq.s32.totalorder %s29, 0
        // Predicated region
        $region33: #{tpu_custom_call.1} parent=27 // pred_check
          %p257 = pneg %p256
        $region34: #{tpu_custom_call.1} parent=27 // pred_check_branch
          %259 = sbr.rel (%p257) target = $region36
        $region35: #{tpu_custom_call.1} parent=27 // pred_region
          %260 = vst [vmem:[%s236] sm:$0xff] 0.0
          %261 = vst [vmem:[%s243] sm:$0xff] 0.0
        $region36: #{tpu_custom_call.1} parent=27 // pred_fallthru
          _
        %v262 = vld [vmem:[%s210] sm:$0xf]
        %v263 = vld [vmem:[%s252] sm:$0x1]
        %v264 = vunpack.c.0.s8 %v263
        %v265 = vlaneseq
        %v266 = vand.u32 %v265, 127
        %v267 = vlaneseq
        %v268 = vshrl.u32 %v267, 7
        %v269 = vand.u32 %v266, 1
        %vm270 = vcmp.eq.s32.totalorder %v269, 0
        %271 = vrot.lane.b32.xlu0 %v262, 127
        %v272 = vpop.permute.xlu0 %271
        %273 = vrot.lane.b32.xlu0 %v262, 1
        %v274 = vpop.permute.xlu0 %273
        %v275 = vsel %vm270, %v272, %v274
        %v276 = vsub.f32 %v275, %v262
        %v277 = vmax.f32 %v276, 0.0
        %v278 = vand.u32 2147483647, %v276
        %v279 = vsub.f32 0.0, %v278
        %v280 = vmul.f32 %v279, 1.442695
        %v281 = vpow.pop %v280
        %v282 = vadd.f32 %v281, 1.0
        %v283 = vlog2.pop %v282
        %v284 = vmul.f32 %v283, 0.6931472
        %v285 = vadd.f32 %v277, %v284
        %vm286 = vcmp.eq.s32.totalorder %v269, 1
        %v287 = vsel %vm286, 0.55932206, 4.714286
        %vm288 = vcmp.eq.s32.totalorder %v264, %v269
        %s289 = sadd.s32 %s28, %s29
        %s290 = smul.u32 %s289, 4
        %v291 = vstv %s290
        %v292 = vadd.s32 %v291, %v268
        %v293 = vmul.u32 %v292, 128
        %v294 = vadd.s32 %v293, %v266
        %vm295 = vcmp.lt.s32.totalorder %v294, 512
        %vm296 = vmand %vm288, %vm295
        %v297 = vmul.f32 %v287, %v285
        %v298 = vsel %vm296, %v297, 0.0
        %v299 = vsel %vm296, %v287, 0.0
        %v300 = vld [vmem:[%s236] sm:$0x1]
        %vm301 = vcmask 1043456
        %v302 = vsel %vm301, %v298, 0.0
        %v303 = vrot.slane %v302, 4
        %v304 = vadd.f32 %v302, %v303
        %v305 = vrot.slane %v304, 2
        %v306 = vadd.f32 %v304, %v305
        %v307 = vrot.slane %v306, 1
        %v308 = vadd.f32 %v306, %v307
        %v309 = vadd.f32 %v300, %v308
        %310 = vst [vmem:[%s236] sm:$0x1] %v309
        %v311 = vld [vmem:[%s243] sm:$0x1]
        %v312 = vsel %vm301, %v299, 0.0
        %v313 = vrot.slane %v312, 4
        %v314 = vadd.f32 %v312, %v313
        %v315 = vrot.slane %v314, 2
        %v316 = vadd.f32 %v314, %v315
        %v317 = vrot.slane %v316, 1
        %v318 = vadd.f32 %v316, %v317
        %v319 = vadd.f32 %v311, %v318
        %320 = vst [vmem:[%s243] sm:$0x1] %v319
        %s321 = sand.u32 %s108, 1
        %s322 = scalar_lea.sflag [#allocation4], %s321
        %s323 = sand.u32 %s108, 1
        %s324 = smul.addr %s323, 8
        %s325 = scalar_lea.vmem [#allocation5], %s324
        %s326 = sand.u32 %s134, 1
        %s327 = scalar_lea.sflag [#allocation7], %s326
        %s328 = sand.u32 %s134, 1
        %s329 = smul.addr %s328, 8
        %s330 = scalar_lea.vmem [#allocation6], %s329
        // Predicated region
        $region37: #{tpu_custom_call.1} parent=27 // pred_check
          %p331 = pneg %p118
        $region38: #{tpu_custom_call.1} parent=27 // pred_check_branch
          %333 = sbr.rel (%p331) target = $region40
        $region39: #{tpu_custom_call.1} parent=27 // pred_region
          %s335 = ssub.s32 128, 128
          %336 = vsyncadd %s322, %s335
          %s337 = smul.addr %s28, 128
          %s338 = scalar_lea.hbm %s2, %s337
          %s340 = sshll.u32 %s325, 4
          %s341 = int_to_ptr.vmem [resolvable:$true] %s340
          %343 = dma.vmem_to_hbm [thread:$0]  %s341, 128, %s338, %s322
        $region40: #{tpu_custom_call.1} parent=27 // pred_fallthru
          _
        // Predicated region
        $region41: #{tpu_custom_call.1} parent=27 // pred_check
          %p344 = pneg %p144
        $region42: #{tpu_custom_call.1} parent=27 // pred_check_branch
          %346 = sbr.rel (%p344) target = $region44
        $region43: #{tpu_custom_call.1} parent=27 // pred_region
          %s348 = ssub.s32 128, 128
          %349 = vsyncadd %s327, %s348
          %s350 = smul.addr %s28, 128
          %s351 = scalar_lea.hbm %s3, %s350
          %s353 = sshll.u32 %s330, 4
          %s354 = int_to_ptr.vmem [resolvable:$true] %s353
          %356 = dma.vmem_to_hbm [thread:$0]  %s354, 128, %s351, %s327
        $region44: #{tpu_custom_call.1} parent=27 // pred_fallthru
          _
      $region28: #{tpu_custom_call.1} parent=5 // pred_fallthru
        _
      %p357 = scmp.le.s32.totalorder 2, %s19
      // Predicated region
      $region45: #{tpu_custom_call.1} parent=5 // pred_check
        %p358 = pneg %p357
      $region46: #{tpu_custom_call.1} parent=5 // pred_check_branch
        %360 = sbr.rel (%p358) target = $region48
      $region47: #{tpu_custom_call.1} parent=5 // pred_region
        %s361 = ssub.s32 %s19, 2
        // Predicated region
        $region49: #{tpu_custom_call.1} parent=47 // pred_check
          %p362 = pneg %p124
        $region50: #{tpu_custom_call.1} parent=47 // pred_check_branch
          %364 = sbr.rel (%p362) target = $region52
        $region51: #{tpu_custom_call.1} parent=47 // pred_region
          %s365 = sand.u32 %s109, 1
          %s366 = scalar_lea.sflag [#allocation4], %s365
          %s367 = sand.u32 %s109, 1
          %s368 = smul.addr %s367, 8
          %s369 = scalar_lea.vmem [#allocation5], %s368
          %370 = dma.done %s366, 128
        $region52: #{tpu_custom_call.1} parent=47 // pred_fallthru
          _
        // Predicated region
        $region53: #{tpu_custom_call.1} parent=47 // pred_check
          %p371 = pneg %p150
        $region54: #{tpu_custom_call.1} parent=47 // pred_check_branch
          %373 = sbr.rel (%p371) target = $region56
        $region55: #{tpu_custom_call.1} parent=47 // pred_region
          %s374 = sand.u32 %s135, 1
          %s375 = scalar_lea.sflag [#allocation7], %s374
          %s376 = sand.u32 %s135, 1
          %s377 = smul.addr %s376, 8
          %s378 = scalar_lea.vmem [#allocation6], %s377
          %379 = dma.done %s375, 128
        $region56: #{tpu_custom_call.1} parent=47 // pred_fallthru
          _
      $region48: #{tpu_custom_call.1} parent=5 // pred_fallthru
        _
    $region6: #{tpu_custom_call.1} parent=1 // loop_footer
      %s23 = sadd.s32 1, %s19
    $region7: #{tpu_custom_call.1} parent=1 // loop_footer_branch
      %18 = sbr.rel target = $region3
    $region8: #{tpu_custom_call.1} parent=1 // loop_exit
      _
    %380 = vsyncpa [#allocation3], 1
    %s381 = scalar_lea.sflag [#allocation3], 1
    %382 = vsyncpa %s381, 1
    %383 = vsyncpa [#allocation4], 1
    %s384 = scalar_lea.sflag [#allocation4], 1
    %385 = vsyncpa %s384, 1
    %386 = vsyncpa [#allocation7], 1
    %s387 = scalar_lea.sflag [#allocation7], 1
    %388 = vsyncpa %s387, 1

</llo_original>
